<compile_context>
chip_gen: v7x
topology: tpu7x:2x2x1
jax: 0.10.0
libtpu: 0.0.40
codegen_flags: <defaults>
</compile_context>

<pallas_src>
import jax
import jax.numpy as jnp
from jax.experimental import pallas as pl
from jax.experimental.pallas import tpu as pltpu

LN_EPS = 1e-5


def _round_up(x, m):
    return (x + m - 1) // m * m


# ---------------------------------------------------------------------------
# Kernel: one (tm, D) row block, weights fully resident
# ---------------------------------------------------------------------------
def feedforward_kernel(x_ref, g_ref, b_ref, w1_ref, b1_ref, w2_ref, b2_ref, o_ref):
    x = x_ref[...].astype(jnp.float32)                         # (tm, D)

    # LayerNorm (f32)
    mu = jnp.mean(x, axis=-1, keepdims=True)
    var = jnp.mean((x - mu) ** 2, axis=-1, keepdims=True)
    xn = (x - mu) * jax.lax.rsqrt(var + LN_EPS) * g_ref[...] + b_ref[...]

    # Linear 1: bf16 (or f32) operands, f32 accumulation on the MXU
    h = jnp.dot(xn.astype(w1_ref.dtype), w1_ref[...],
                preferred_element_type=jnp.float32) + b1_ref[...]

    # exact (erf-based) GELU — matches PyTorch nn.GELU() default
    h = 0.5 * h * (1.0 + jax.lax.erf(h * (2.0 ** -0.5)))

    # Linear 2
    y = jnp.dot(h.astype(w2_ref.dtype), w2_ref[...],
                preferred_element_type=jnp.float32) + b2_ref[...]

    o_ref[...] = y.astype(o_ref.dtype)                         # no residual in this module


# ---------------------------------------------------------------------------
# Wrapper: flatten leading dims, pad rows, grid over row blocks
# ---------------------------------------------------------------------------
def feedforward(x, params, *, block_rows=256, compute_dtype=jnp.bfloat16):
    orig_shape = x.shape
    D = orig_shape[-1]
    rows = 1
    for s in orig_shape[:-1]:
        rows *= int(s)

    xf = x.reshape(rows, D)

    block_rows = _round_up(max(block_rows, 8), 8)
    tm = min(block_rows, _round_up(rows, 8))                   # multiple of 8
    rows_p = _round_up(rows, tm)
    if rows_p != rows:
        xf = jnp.pad(xf, ((0, rows_p - rows), (0, 0)))

    H = params["w1"].shape[1]
    # cast weights once outside the kernel so the per-block weight DMA is halved
    w1 = params["w1"].astype(compute_dtype)
    w2 = params["w2"].astype(compute_dtype)

    full2d = lambda shape: pl.BlockSpec(shape, lambda i: (0, 0))

    out = pl.pallas_call(
        feedforward_kernel,
        out_shape=jax.ShapeDtypeStruct((rows_p, D), x.dtype),
        grid=(rows_p // tm,),
        in_specs=[
            pl.BlockSpec((tm, D), lambda i: (i, 0)),           # x row block
            full2d((1, D)),                                    # ln gamma
            full2d((1, D)),                                    # ln beta
            full2d((D, H)),                                    # w1
            full2d((1, H)),                                    # b1
            full2d((H, D)),                                    # w2
            full2d((1, D)),                                    # b2
        ],
        out_specs=pl.BlockSpec((tm, D), lambda i: (i, 0)),
        compiler_params=pltpu.CompilerParams(
            dimension_semantics=("parallel",)),
    )(xf, params["ln_g"], params["ln_b"], w1, params["b1"], w2, params["b2"])

    if rows_p != rows:
        out = out[:rows]
    return out.reshape(orig_shape)


# ---------------------------------------------------------------------------
# Deterministic parameter init (matches nn.LayerNorm / nn.Linear shapes,
# Linear weights stored transposed: (in_features, out_features))
# ---------------------------------------------------------------------------
def init_params(key, dim, hidden_dim):
    k1, k2, k3, k4, k5, k6 = jax.random.split(key, 6)
    return dict(
        ln_g=1.0 + 0.1 * jax.random.normal(k1, (1, dim), jnp.float32),
        ln_b=0.05 * jax.random.normal(k2, (1, dim), jnp.float32),
        w1=0.1 * jax.random.normal(k3, (dim, hidden_dim), jnp.float32),
        b1=0.05 * jax.random.normal(k4, (1, hidden_dim), jnp.float32),
        w2=0.1 * jax.random.normal(k5, (hidden_dim, dim), jnp.float32),
        b2=0.05 * jax.random.normal(k6, (1, dim), jnp.float32),
    )


# ---------------------------------------------------------------------------
# Pure-JAX reference mirroring the PyTorch forward exactly
# ---------------------------------------------------------------------------
def reference_feedforward(x, params):
    g, b = params["ln_g"][0], params["ln_b"][0]
    mu = x.mean(-1, keepdims=True)
    var = ((x - mu) ** 2).mean(-1, keepdims=True)
    xn = (x - mu) / jnp.sqrt(var + LN_EPS) * g + b
    h = xn @ params["w1"] + params["b1"][0]
    h = jax.nn.gelu(h, approximate=False)
    return h @ params["w2"] + params["b2"][0]


if __name__ == "__main__":
    dim, hidden_dim = 32, 64

    key = jax.random.PRNGKey(0)
    key, pk = jax.random.split(key)
    params = init_params(pk, dim, hidden_dim)

    key, k1, k2, k3 = jax.random.split(key, 4)
    x1 = jax.random.normal(k1, (2, 8, dim), jnp.float32)      # main (B, N, dim) case
    x2 = jax.random.normal(k2, (3, 5, dim), jnp.float32)      # rows not multiple of 8 -> pad path
    x3 = jax.random.normal(k3, (4, 100, dim), jnp.float32)    # multi-block grid + padding

    # f32-operand path: tight check against the PyTorch-equivalent reference
    out_f32 = jax.block_until_ready(feedforward(x1, params, compute_dtype=jnp.float32))
    ref1 = reference_feedforward(x1, params)
    assert out_f32.shape == x1.shape
    assert jnp.allclose(out_f32, ref1, atol=2e-4, rtol=2e-4), "f32 mismatch vs reference"

    # bf16 matmul operands (f32 accumulation): perf path, looser tolerance
    for xin in (x1, x2, x3):
        out = jax.block_until_ready(feedforward(xin, params, compute_dtype=jnp.bfloat16))
        ref = reference_feedforward(xin, params)
        assert out.shape == xin.shape
        assert jnp.allclose(out, ref, atol=3e-2, rtol=3e-2), "bf16 mismatch vs reference"

    print("KERNEL_OK")
</pallas_src>

<mosaic_0001>
module attributes {stable_mosaic.version = 11 : i64} {
  func.func @feedforward_kernel(%arg0: i32, %arg1: memref<16x32xf32, #tpu.memory_space<vmem>>, %arg2: memref<1x32xf32, #tpu.memory_space<vmem>>, %arg3: memref<1x32xf32, #tpu.memory_space<vmem>>, %arg4: memref<32x64xf32, #tpu.memory_space<vmem>>, %arg5: memref<1x64xf32, #tpu.memory_space<vmem>>, %arg6: memref<64x32xf32, #tpu.memory_space<vmem>>, %arg7: memref<1x32xf32, #tpu.memory_space<vmem>>, %arg8: memref<16x32xf32, #tpu.memory_space<vmem>>) attributes {dimension_semantics = [#tpu.dimension_semantics<parallel>], iteration_bounds = array<i64: 1>, scalar_prefetch = 0 : i64, scratch_operands = 0 : i64, tpu.core_type = #tpu.core_type<tc>, window_params = [{transform_indices = @transform_0, window_bounds = array<i64: 16, 32>}, {pipeline_mode = #tpu.pipeline_mode<synchronous>, transform_indices = @transform_1, window_bounds = array<i64: 1, 32>}, {pipeline_mode = #tpu.pipeline_mode<synchronous>, transform_indices = @transform_2, window_bounds = array<i64: 1, 32>}, {pipeline_mode = #tpu.pipeline_mode<synchronous>, transform_indices = @transform_3, window_bounds = array<i64: 32, 64>}, {pipeline_mode = #tpu.pipeline_mode<synchronous>, transform_indices = @transform_4, window_bounds = array<i64: 1, 64>}, {pipeline_mode = #tpu.pipeline_mode<synchronous>, transform_indices = @transform_5, window_bounds = array<i64: 64, 32>}, {pipeline_mode = #tpu.pipeline_mode<synchronous>, transform_indices = @transform_6, window_bounds = array<i64: 1, 32>}, {transform_indices = @transform_7, window_bounds = array<i64: 16, 32>}]} {
    %c0 = arith.constant 0 : index
    %c0_0 = arith.constant 0 : index
    %0 = vector.load %arg1[%c0, %c0_0] : memref<16x32xf32, #tpu.memory_space<vmem>>, vector<16x32xf32>
    %cst = arith.constant dense<0.000000e+00> : vector<16xf32>
    %1 = vector.multi_reduction <add>, %0, %cst [1] : vector<16x32xf32> to vector<16xf32>
    %2 = vector.shape_cast %1 : vector<16xf32> to vector<16x1xf32>
    %cst_1 = arith.constant 3.200000e+01 : f32
    %3 = vector.broadcast %cst_1 : f32 to vector<16x1xf32>
    %4 = arith.divf %2, %3 : vector<16x1xf32>
    %5 = vector.broadcast %4 : vector<16x1xf32> to vector<16x32xf32>
    %6 = arith.subf %0, %5 : vector<16x32xf32>
    %7 = arith.mulf %6, %6 : vector<16x32xf32>
    %cst_2 = arith.constant dense<0.000000e+00> : vector<16xf32>
    %8 = vector.multi_reduction <add>, %7, %cst_2 [1] : vector<16x32xf32> to vector<16xf32>
    %9 = vector.shape_cast %8 : vector<16xf32> to vector<16x1xf32>
    %cst_3 = arith.constant 3.200000e+01 : f32
    %10 = vector.broadcast %cst_3 : f32 to vector<16x1xf32>
    %11 = arith.divf %9, %10 : vector<16x1xf32>
    %12 = vector.broadcast %4 : vector<16x1xf32> to vector<16x32xf32>
    %13 = arith.subf %0, %12 : vector<16x32xf32>
    %cst_4 = arith.constant 9.99999974E-6 : f32
    %14 = vector.broadcast %cst_4 : f32 to vector<16x1xf32>
    %15 = arith.addf %11, %14 : vector<16x1xf32>
    %16 = math.rsqrt %15 : vector<16x1xf32>
    %17 = vector.broadcast %16 : vector<16x1xf32> to vector<16x32xf32>
    %18 = arith.mulf %13, %17 : vector<16x32xf32>
    %c0_5 = arith.constant 0 : index
    %c0_6 = arith.constant 0 : index
    %19 = vector.load %arg2[%c0_5, %c0_6] : memref<1x32xf32, #tpu.memory_space<vmem>>, vector<1x32xf32>
    %20 = vector.broadcast %19 : vector<1x32xf32> to vector<16x32xf32>
    %21 = arith.mulf %18, %20 : vector<16x32xf32>
    %c0_7 = arith.constant 0 : index
    %c0_8 = arith.constant 0 : index
    %22 = vector.load %arg3[%c0_7, %c0_8] : memref<1x32xf32, #tpu.memory_space<vmem>>, vector<1x32xf32>
    %23 = vector.broadcast %22 : vector<1x32xf32> to vector<16x32xf32>
    %24 = arith.addf %21, %23 : vector<16x32xf32>
    %c0_9 = arith.constant 0 : index
    %c0_10 = arith.constant 0 : index
    %25 = vector.load %arg4[%c0_9, %c0_10] : memref<32x64xf32, #tpu.memory_space<vmem>>, vector<32x64xf32>
    %cst_11 = arith.constant dense<0.000000e+00> : vector<16x64xf32>
    %26 = tpu.matmul %24, %25, %cst_11 {dimension_numbers = #tpu.dot_dimension_numbers<[1], [0], [0], [1], [0, 0, 1, 1], [], []>} : vector<16x32xf32>, vector<32x64xf32>, vector<16x64xf32> -> vector<16x64xf32>
    %c0_12 = arith.constant 0 : index
    %c0_13 = arith.constant 0 : index
    %27 = vector.load %arg5[%c0_12, %c0_13] : memref<1x64xf32, #tpu.memory_space<vmem>>, vector<1x64xf32>
    %28 = vector.broadcast %27 : vector<1x64xf32> to vector<16x64xf32>
    %29 = arith.addf %26, %28 : vector<16x64xf32>
    %cst_14 = arith.constant 5.000000e-01 : f32
    %30 = vector.broadcast %cst_14 : f32 to vector<16x64xf32>
    %31 = arith.mulf %30, %29 : vector<16x64xf32>
    %cst_15 = arith.constant 0.707106769 : f32
    %32 = vector.broadcast %cst_15 : f32 to vector<16x64xf32>
    %33 = arith.mulf %29, %32 : vector<16x64xf32>
    %34 = math.erf %33 : vector<16x64xf32>
    %cst_16 = arith.constant 1.000000e+00 : f32
    %35 = vector.broadcast %cst_16 : f32 to vector<16x64xf32>
    %36 = arith.addf %35, %34 : vector<16x64xf32>
    %37 = arith.mulf %31, %36 : vector<16x64xf32>
    %c0_17 = arith.constant 0 : index
    %c0_18 = arith.constant 0 : index
    %38 = vector.load %arg6[%c0_17, %c0_18] : memref<64x32xf32, #tpu.memory_space<vmem>>, vector<64x32xf32>
    %cst_19 = arith.constant dense<0.000000e+00> : vector<16x32xf32>
    %39 = tpu.matmul %37, %38, %cst_19 {dimension_numbers = #tpu.dot_dimension_numbers<[1], [0], [0], [1], [0, 0, 1, 1], [], []>} : vector<16x64xf32>, vector<64x32xf32>, vector<16x32xf32> -> vector<16x32xf32>
    %c0_20 = arith.constant 0 : index
    %c0_21 = arith.constant 0 : index
    %40 = vector.load %arg7[%c0_20, %c0_21] : memref<1x32xf32, #tpu.memory_space<vmem>>, vector<1x32xf32>
    %41 = vector.broadcast %40 : vector<1x32xf32> to vector<16x32xf32>
    %42 = arith.addf %39, %41 : vector<16x32xf32>
    %c0_22 = arith.constant 0 : index
    %c0_23 = arith.constant 0 : index
    %43 = vector.load %arg8[%c0_22, %c0_23] : memref<16x32xf32, #tpu.memory_space<vmem>>, vector<16x32xf32>
    tpu.vector_store %arg8[%c0_22, %c0_23], %42 {strides = array<i32>} : memref<16x32xf32, #tpu.memory_space<vmem>>, vector<16x32xf32>,
    return
  }
  func.func @transform_0(%arg0: i32) -> (i32, i32) {
    %c0_i32 = arith.constant 0 : i32
    %c0_i32_0 = arith.constant 0 : i32
    return %arg0, %c0_i32 : i32, i32
  }
  func.func @transform_1(%arg0: i32) -> (i32, i32) {
    %c0_i32 = arith.constant 0 : i32
    %c0_i32_0 = arith.constant 0 : i32
    %c0_i32_1 = arith.constant 0 : i32
    return %c0_i32, %c0_i32_0 : i32, i32
  }
  func.func @transform_2(%arg0: i32) -> (i32, i32) {
    %c0_i32 = arith.constant 0 : i32
    %c0_i32_0 = arith.constant 0 : i32
    %c0_i32_1 = arith.constant 0 : i32
    return %c0_i32, %c0_i32_0 : i32, i32
  }
  func.func @transform_3(%arg0: i32) -> (i32, i32) {
    %c0_i32 = arith.constant 0 : i32
    %c0_i32_0 = arith.constant 0 : i32
    %c0_i32_1 = arith.constant 0 : i32
    return %c0_i32, %c0_i32_0 : i32, i32
  }
  func.func @transform_4(%arg0: i32) -> (i32, i32) {
    %c0_i32 = arith.constant 0 : i32
    %c0_i32_0 = arith.constant 0 : i32
    %c0_i32_1 = arith.constant 0 : i32
    return %c0_i32, %c0_i32_0 : i32, i32
  }
  func.func @transform_5(%arg0: i32) -> (i32, i32) {
    %c0_i32 = arith.constant 0 : i32
    %c0_i32_0 = arith.constant 0 : i32
    %c0_i32_1 = arith.constant 0 : i32
    return %c0_i32, %c0_i32_0 : i32, i32
  }
  func.func @transform_6(%arg0: i32) -> (i32, i32) {
    %c0_i32 = arith.constant 0 : i32
    %c0_i32_0 = arith.constant 0 : i32
    %c0_i32_1 = arith.constant 0 : i32
    return %c0_i32, %c0_i32_0 : i32, i32
  }
  func.func @transform_7(%arg0: i32) -> (i32, i32) {
    %c0_i32 = arith.constant 0 : i32
    %c0_i32_0 = arith.constant 0 : i32
    return %arg0, %c0_i32 : i32, i32
  }
}

</mosaic_0001>

<llo_original>
// kernel: tpu_custom_call.1
$region0: #{tpu_custom_call.1}
  #allocation0 [shape = 'u32[]', space=smem, size = 0x4, offset = 0x4, fixed_abs, tag = 'smem constant byte address 0x4 - core index']
  #allocation1 [shape = 'u32[144,128]{1,0:T(1,128)}', space=vmem, size = 0x12000, scoped, tag = 'internal scratch']
  %s0 = inlined_call_operand.vmem [shape: f32[16,32], index: 0, kind: input, shape index: {}]
  %s1 = inlined_call_operand.vmem [shape: f32[1,32], index: 1, kind: input, shape index: {}]
  %s2 = inlined_call_operand.vmem [shape: f32[1,32], index: 2, kind: input, shape index: {}]
  %s3 = inlined_call_operand.vmem [shape: f32[32,64], index: 3, kind: input, shape index: {}]
  %s4 = inlined_call_operand.vmem [shape: f32[1,64], index: 4, kind: input, shape index: {}]
  %s5 = inlined_call_operand.vmem [shape: f32[64,32], index: 5, kind: input, shape index: {}]
  %s6 = inlined_call_operand.vmem [shape: f32[1,32], index: 6, kind: input, shape index: {}]
  %s7 = inlined_call_operand.hbm [shape: f32[16,32], index: 7, kind: output, shape index: {}]
  %s8 = sld [smem:[#allocation0]]
  $region38: #{tpu_custom_call.1} parent=0
    _
  %s10 = ssub.s32 1, %s8
  %s11 = scalar_select 0, %s10, %s8
  $region1: #{tpu_custom_call.1} parent=0
    #allocation2 [shape = 'u8[8192]{0}', space=vmem, size = 0x2000, scoped, tag = 'output window, operand 0, single buffered']
    #allocation3 [shape = 's32[1]{0}', space=sflag, size = 0x4, scoped, tag = 'scoped memory for tpu_custom_call.1']
    %12 = vsyncpa [#allocation3], 0
    // Predicated region
    $region2: #{tpu_custom_call.1} parent=1 // pred_check
      _
    $region3: #{tpu_custom_call.1} parent=1 // pred_check_branch
      %14 = sbr.rel (0) target = $region5
    $region4: #{tpu_custom_call.1} parent=1 // pred_region
      _
    $region5: #{tpu_custom_call.1} parent=1 // pred_fallthru
      _
    // Predicated region
    $region6: #{tpu_custom_call.1} parent=1 // pred_check
      _
    $region7: #{tpu_custom_call.1} parent=1 // pred_check_branch
      %16 = sbr.rel (0) target = $region9
    $region8: #{tpu_custom_call.1} parent=1 // pred_region
      _
    $region9: #{tpu_custom_call.1} parent=1 // pred_fallthru
      _
    // Predicated region
    $region10: #{tpu_custom_call.1} parent=1 // pred_check
      _
    $region11: #{tpu_custom_call.1} parent=1 // pred_check_branch
      %18 = sbr.rel (0) target = $region13
    $region12: #{tpu_custom_call.1} parent=1 // pred_region
      _
    $region13: #{tpu_custom_call.1} parent=1 // pred_fallthru
      _
    // Predicated region
    $region14: #{tpu_custom_call.1} parent=1 // pred_check
      _
    $region15: #{tpu_custom_call.1} parent=1 // pred_check_branch
      %20 = sbr.rel (0) target = $region17
    $region16: #{tpu_custom_call.1} parent=1 // pred_region
      _
    $region17: #{tpu_custom_call.1} parent=1 // pred_fallthru
      _
    // Predicated region
    $region18: #{tpu_custom_call.1} parent=1 // pred_check
      _
    $region19: #{tpu_custom_call.1} parent=1 // pred_check_branch
      %22 = sbr.rel (0) target = $region21
    $region20: #{tpu_custom_call.1} parent=1 // pred_region
      _
    $region21: #{tpu_custom_call.1} parent=1 // pred_fallthru
      _
    // Predicated region
    $region22: #{tpu_custom_call.1} parent=1 // pred_check
      _
    $region23: #{tpu_custom_call.1} parent=1 // pred_check_branch
      %24 = sbr.rel (0) target = $region25
    $region24: #{tpu_custom_call.1} parent=1 // pred_region
      _
    $region25: #{tpu_custom_call.1} parent=1 // pred_fallthru
      _
    // Predicated region
    $region26: #{tpu_custom_call.1} parent=1 // pred_check
      _
    $region27: #{tpu_custom_call.1} parent=1 // pred_check_branch
      %26 = sbr.rel (0) target = $region29
    $region28: #{tpu_custom_call.1} parent=1 // pred_region
      _
    $region29: #{tpu_custom_call.1} parent=1 // pred_fallthru
      _
    %v27 = vld [vmem:[%s0] sm:$0xff]
    %v28 = vld [vmem:[%s0 + $0x8] sm:$0xff]
    %vm29 = vcmask 261120
    %v30 = vsel %vm29, %v27, 0.0
    %31 = vadd.xlane.f32.xlu0 %v30
    %v32 = vpop.xlane.xlu0 %31
    %v33 = vsel %vm29, %v28, 0.0
    %34 = vadd.xlane.f32.xlu0 %v33
    %v35 = vpop.xlane.xlu0 %34
    %v36 = vrcp.pop 32.0
    %v37 = vmul.f32 %v32, %v36
    %v38 = vmul.f32 %v35, %v36
    %v39 = vsub.f32 %v27, %v37
    %v40 = vsub.f32 %v28, %v38
    %v41 = vmul.f32 %v39, %v39
    %v42 = vmul.f32 %v40, %v40
    %v43 = vsel %vm29, %v41, 0.0
    %44 = vadd.xlane.f32.xlu0 %v43
    %v45 = vpop.xlane.xlu0 %44
    %v46 = vsel %vm29, %v42, 0.0
    %47 = vadd.xlane.f32.xlu0 %v46
    %v48 = vpop.xlane.xlu0 %47
    %v49 = vmul.f32 %v45, %v36
    %v50 = vmul.f32 %v48, %v36
    %v51 = vadd.f32 %v49, 1e-05
    %v52 = vadd.f32 %v50, 1e-05
    %v53 = vrsqrt.pop %v51
    %v54 = vrsqrt.pop %v52
    %v55 = vmul.f32 %v39, %v53
    %v56 = vmul.f32 %v40, %v54
    %v57 = vld [vmem:[%s1] sm:$0x1]
    %v59 = vlaneseq
    %v60 = vshrl.u32 %v59, 7
    %v61 = vsub.s32 0, %v60
    %v62 = vrot.slane %v57, %v61
    %v64 = vmul.f32 %v55, %v62
    %v65 = vmul.f32 %v56, %v62
    %v66 = vld [vmem:[%s2] sm:$0x1]
    %v68 = vlaneseq
    %v69 = vshrl.u32 %v68, 7
    %v70 = vsub.s32 0, %v69
    %v71 = vrot.slane %v66, %v70
    %v73 = vadd.f32 %v64, %v71
    %v74 = vadd.f32 %v65, %v71
    %v75 = vld [vmem:[%s3] sm:$0xff]
    %v76 = vld [vmem:[%s3 + $0x8] sm:$0xff]
    %v77 = vld [vmem:[%s3 + $0x10] sm:$0xff]
    %v78 = vld [vmem:[%s3 + $0x18] sm:$0xff]
    %v79 = vld [vmem:[%s4] sm:$0x1]
    %v81 = vlaneseq
    %v82 = vshrl.u32 %v81, 7
    %v83 = vsub.s32 0, %v82
    %v84 = vrot.slane %v79, %v83
    %v87 = vsel %vm29, %v73, 0
    %v90 = vsel %vm29, %v74, 0
    %92 = vmatprep.subr.mxu0 0.0
    %93 = vmatpush1.msra.mxu0 %v75
    %94 = vmatprep.subr.mxu0 0.0
    %95 = vmatpush1.msra.mxu0 %v76
    %96 = vmatprep.subr.mxu0 0.0
    %97 = vmatpush1.msra.mxu0 %v77
    %98 = vmatprep.subr.mxu0 0.0
    %99 = vmatpush1.msra.mxu0 %v78
    %100 = vmatprep.subr.mxu0 0.0
    %101 = vmatpush1.msra.mxu0 0.0
    %102 = vmatprep.subr.mxu0 0.0
    %103 = vmatpush1.msra.mxu0 0.0
    %104 = vmatprep.subr.mxu0 0.0
    %105 = vmatpush1.msra.mxu0 0.0
    %106 = vmatprep.subr.mxu0 0.0
    %107 = vmatpush1.msra.mxu0 0.0
    %108 = vmatprep.subr.mxu0 0.0
    %109 = vmatpush1.msra.mxu0 0.0
    %110 = vmatprep.subr.mxu0 0.0
    %111 = vmatpush1.msra.mxu0 0.0
    %112 = vmatprep.subr.mxu0 0.0
    %113 = vmatpush1.msra.mxu0 0.0
    %114 = vmatprep.subr.mxu0 0.0
    %115 = vmatpush1.msra.mxu0 0.0
    %116 = vmatprep.subr.mxu0 0.0
    %117 = vmatpush1.msra.mxu0 0.0
    %118 = vmatprep.subr.mxu0 0.0
    %119 = vmatpush1.msra.mxu0 0.0
    %120 = vmatprep.subr.mxu0 0.0
    %121 = vmatpush1.msra.mxu0 0.0
    %122 = vmatprep.subr.mxu0 0.0
    %123 = vmatpush1.msra.mxu0 0.0
    %124 = vmatprep.subr.mxu0 0.0
    %125 = vmatpush1.msra.mxu0 0.0
    %126 = vmatprep.subr.mxu0 0.0
    %127 = vmatpush1.msra.mxu0 0.0
    %128 = vmatprep.subr.mxu0 0.0
    %129 = vmatpush1.msra.mxu0 0.0
    %130 = vmatprep.subr.mxu0 0.0
    %131 = vmatpush1.msra.mxu0 0.0
    %132 = vmatprep.subr.mxu0 0.0
    %133 = vmatpush1.msra.mxu0 0.0
    %134 = vmatprep.subr.mxu0 0.0
    %135 = vmatpush1.msra.mxu0 0.0
    %136 = vmatprep.subr.mxu0 0.0
    %137 = vmatpush1.msra.mxu0 0.0
    %138 = vmatprep.subr.mxu0 0.0
    %139 = vmatpush1.msra.mxu0 0.0
    %140 = vmatprep.subr.mxu0 0.0
    %141 = vmatpush1.msra.mxu0 0.0
    %142 = vmatprep.subr.mxu0 0.0
    %143 = vmatpush1.msra.mxu0 0.0
    %144 = vmatprep.subr.mxu0 0.0
    %145 = vmatpush1.msra.mxu0 0.0
    %146 = vmatprep.subr.mxu0 0.0
    %147 = vmatpush1.msra.mxu0 0.0
    %148 = vmatprep.subr.mxu0 0.0
    %149 = vmatpush1.msra.mxu0 0.0
    %150 = vmatprep.subr.mxu0 0.0
    %151 = vmatpush1.msra.mxu0 0.0
    %152 = vmatprep.subr.mxu0 0.0
    %153 = vmatpush1.msra.mxu0 0.0
    %154 = vmatprep.subr.mxu0 0.0
    %155 = vmatpush1.msra.mxu0 0.0
    %156 = vmatprep.mubr.f32.mxu0 0.0
    %157 = vmatmul.mubr.f32.gmra.mrb[0].mxu0 %v87
    %v158 = vpop.f32.mrb[0].mxu0
    %v159 = vadd.f32 %v84, %v158
    %v160 = vpop.f32.mrb[0].mxu0
    %161 = vmatprep.mubr.f32.mxu0 0.0
    %162 = vmatmul.mubr.f32.gmra.mrb[0].mxu0 %v90
    %v163 = vpop.f32.mrb[0].mxu0
    %v164 = vadd.f32 %v84, %v163
    %v165 = vpop.f32.mrb[0].mxu0
    %166 = vdwg.mxu0
    %v167 = vmul.f32 %v159, 0.5
    %v168 = vmul.f32 %v164, 0.5
    %v169 = vmul.f32 %v159, 0.70710677
    %v170 = vmul.f32 %v164, 0.70710677
    %v171 = verf.f32.pop %v169
    %v172 = verf.f32.pop %v170
    %v173 = vadd.f32 %v171, 1.0
    %v174 = vadd.f32 %v172, 1.0
    %v175 = vmul.f32 %v167, %v173
    %v176 = vmul.f32 %v168, %v174
    %v177 = vld [vmem:[%s5] sm:$0xff]
    %v178 = vld [vmem:[%s5 + $0x8] sm:$0xff]
    %v179 = vld [vmem:[%s5 + $0x10] sm:$0xff]
    %v180 = vld [vmem:[%s5 + $0x18] sm:$0xff]
    %v181 = vld [vmem:[%s5 + $0x20] sm:$0xff]
    %v182 = vld [vmem:[%s5 + $0x28] sm:$0xff]
    %v183 = vld [vmem:[%s5 + $0x30] sm:$0xff]
    %v184 = vld [vmem:[%s5 + $0x38] sm:$0xff]
    %v185 = vld [vmem:[%s6] sm:$0x1]
    %v187 = vlaneseq
    %v188 = vshrl.u32 %v187, 7
    %v189 = vsub.s32 0, %v188
    %v190 = vrot.slane %v185, %v189
    %vm192 = vcmask 523264
    %v194 = vsel %vm192, %v175, 0
    %v197 = vsel %vm192, %v176, 0
    %199 = vmatprep.subr.mxu0 0.0
    %200 = vmatpush1.msra.mxu0 %v177
    %201 = vmatprep.subr.mxu0 0.0
    %202 = vmatpush1.msra.mxu0 %v178
    %203 = vmatprep.subr.mxu0 0.0
    %204 = vmatpush1.msra.mxu0 %v179
    %205 = vmatprep.subr.mxu0 0.0
    %206 = vmatpush1.msra.mxu0 %v180
    %207 = vmatprep.subr.mxu0 0.0
    %208 = vmatpush1.msra.mxu0 %v181
    %209 = vmatprep.subr.mxu0 0.0
    %210 = vmatpush1.msra.mxu0 %v182
    %211 = vmatprep.subr.mxu0 0.0
    %212 = vmatpush1.msra.mxu0 %v183
    %213 = vmatprep.subr.mxu0 0.0
    %214 = vmatpush1.msra.mxu0 %v184
    %215 = vmatprep.subr.mxu0 0.0
    %216 = vmatpush1.msra.mxu0 0.0
    %217 = vmatprep.subr.mxu0 0.0
    %218 = vmatpush1.msra.mxu0 0.0
    %219 = vmatprep.subr.mxu0 0.0
    %220 = vmatpush1.msra.mxu0 0.0
    %221 = vmatprep.subr.mxu0 0.0
    %222 = vmatpush1.msra.mxu0 0.0
    %223 = vmatprep.subr.mxu0 0.0
    %224 = vmatpush1.msra.mxu0 0.0
    %225 = vmatprep.subr.mxu0 0.0
    %226 = vmatpush1.msra.mxu0 0.0
    %227 = vmatprep.subr.mxu0 0.0
    %228 = vmatpush1.msra.mxu0 0.0
    %229 = vmatprep.subr.mxu0 0.0
    %230 = vmatpush1.msra.mxu0 0.0
    %231 = vmatprep.subr.mxu0 0.0
    %232 = vmatpush1.msra.mxu0 0.0
    %233 = vmatprep.subr.mxu0 0.0
    %234 = vmatpush1.msra.mxu0 0.0
    %235 = vmatprep.subr.mxu0 0.0
    %236 = vmatpush1.msra.mxu0 0.0
    %237 = vmatprep.subr.mxu0 0.0
    %238 = vmatpush1.msra.mxu0 0.0
    %239 = vmatprep.subr.mxu0 0.0
    %240 = vmatpush1.msra.mxu0 0.0
    %241 = vmatprep.subr.mxu0 0.0
    %242 = vmatpush1.msra.mxu0 0.0
    %243 = vmatprep.subr.mxu0 0.0
    %244 = vmatpush1.msra.mxu0 0.0
    %245 = vmatprep.subr.mxu0 0.0
    %246 = vmatpush1.msra.mxu0 0.0
    %247 = vmatprep.subr.mxu0 0.0
    %248 = vmatpush1.msra.mxu0 0.0
    %249 = vmatprep.subr.mxu0 0.0
    %250 = vmatpush1.msra.mxu0 0.0
    %251 = vmatprep.subr.mxu0 0.0
    %252 = vmatpush1.msra.mxu0 0.0
    %253 = vmatprep.subr.mxu0 0.0
    %254 = vmatpush1.msra.mxu0 0.0
    %255 = vmatprep.subr.mxu0 0.0
    %256 = vmatpush1.msra.mxu0 0.0
    %257 = vmatprep.subr.mxu0 0.0
    %258 = vmatpush1.msra.mxu0 0.0
    %259 = vmatprep.subr.mxu0 0.0
    %260 = vmatpush1.msra.mxu0 0.0
    %261 = vmatprep.subr.mxu0 0.0
    %262 = vmatpush1.msra.mxu0 0.0
    %263 = vmatprep.mubr.f32.mxu0 0.0
    %264 = vmatmul.mubr.f32.gmra.mrb[0].mxu0 %v194
    %v265 = vpop.f32.mrb[0].mxu0
    %v266 = vadd.f32 %v190, %v265
    %v267 = vpop.f32.mrb[0].mxu0
    %268 = vmatprep.mubr.f32.mxu0 0.0
    %269 = vmatmul.mubr.f32.gmra.mrb[0].mxu0 %v197
    %v270 = vpop.f32.mrb[0].mxu0
    %v271 = vadd.f32 %v190, %v270
    %v272 = vpop.f32.mrb[0].mxu0
    %273 = vdwg.mxu0
    %274 = vst.msk [vmem:[#allocation2] sm:$0xff] %vm29, %v266
    %275 = vst.msk [vmem:[#allocation2 + $0x8] sm:$0xff] %vm29, %v271
    // Predicated region
    $region30: #{tpu_custom_call.1} parent=1 // pred_check
      _
    $region31: #{tpu_custom_call.1} parent=1 // pred_check_branch
      %277 = sbr.rel (0) target = $region33
    $region32: #{tpu_custom_call.1} parent=1 // pred_region
      %s279 = ssub.s32 256, 256
      %280 = vsyncadd [#allocation3], %s279
      %s281 = sshll.u32 [#allocation2], 4
      %s282 = int_to_ptr.vmem [resolvable:$true] %s281
      %287 = dma.vmem_to_hbm [thread:$0]  %s282, 256, %s7, [#allocation3], 128, 128, 8
    $region33: #{tpu_custom_call.1} parent=1 // pred_fallthru
      _
    // Predicated region
    $region34: #{tpu_custom_call.1} parent=1 // pred_check
      _
    $region35: #{tpu_custom_call.1} parent=1 // pred_check_branch
      %289 = sbr.rel (0) target = $region37
    $region36: #{tpu_custom_call.1} parent=1 // pred_region
      %290 = dma.done [#allocation3], 256
    $region37: #{tpu_custom_call.1} parent=1 // pred_fallthru
      _
    %291 = vsyncpa [#allocation3], 1

</llo_original>
